<compile_context>
chip_gen: v6e
topology: v6e:2x2x1
jax: 0.10.0
libtpu: 0.0.40
codegen_flags: <defaults>
</compile_context>

<pallas_src>
import functools

import jax
import jax.numpy as jnp
from jax.experimental import pallas as pl
from jax.experimental.pallas import tpu as pltpu


HEAD_PAD = 128  # lane-dense width of the fused (actor | critic | padding) head matmul


def actor_critic_kernel(x_ref, w1_ref, b12_ref, w2_ref, wh_ref, bh_ref,
                        out_ref, *, n_actions):
    x = x_ref[...]

    # Biases for fc1/fc2 are packed as rows 0/1 of a single (2, hidden) tile.
    b1 = b12_ref[0:1, :]
    b2 = b12_ref[1:2, :]

    # fc1 + relu, fc2 + relu (accumulate in f32 on the MXU)
    h1 = jnp.maximum(
        jnp.dot(x, w1_ref[...], preferred_element_type=jnp.float32) + b1, 0.0)
    h2 = jnp.maximum(
        jnp.dot(h1, w2_ref[...], preferred_element_type=jnp.float32) + b2, 0.0)

    # Fused head: single lane-dense matmul -> [TB, HEAD_PAD]
    #   cols [0, n_actions)   : actor logits (fc3)
    #   col  n_actions        : critic value (fc4)
    #   cols (n_actions, 128) : exact zeros (zero weights / zero bias)
    logits = (jnp.dot(h2, wh_ref[...], preferred_element_type=jnp.float32)
              + bh_ref[...])

    col = jax.lax.broadcasted_iota(jnp.int32, logits.shape, dimension=1)
    is_action = col < n_actions

    # Numerically stable softmax restricted to the action columns.
    masked = jnp.where(is_action, logits, -jnp.inf)
    m = jnp.max(masked, axis=1, keepdims=True)
    e = jnp.exp(masked - m)                       # exp(-inf) = 0 on non-action cols
    denom = jnp.sum(e, axis=1, keepdims=True)
    r = pl.reciprocal(denom, approx=True)         # EUP slot
    r = r * (2.0 - denom * r)                     # one Newton step -> ~f32 accuracy
    dist = e * r

    # Action columns -> softmax probs; value column keeps its raw logit;
    # padding columns stay exactly 0.  Store only the narrow useful window
    # (masked vst; 16x fewer HBM writeback bytes than the full 128-wide slab).
    combined = jnp.where(is_action, dist, logits)
    out_w = out_ref.shape[-1]
    out_ref[...] = combined[:, :out_w].astype(out_ref.dtype)


def pack_params(params):
    """Pack the 4 Linear layers into the fused-kernel layout.

    Call ONCE per model (hoisted out of the forward path); pass the returned
    arrays to `actor_critic_forward`.
    """
    hidden = params["w1"].shape[1]
    n_actions = params["w3"].shape[1]
    if n_actions + 1 > HEAD_PAD:
        raise ValueError(
            f"n_actions + 1 = {n_actions + 1} exceeds fused head width {HEAD_PAD}")

    w_head = jnp.zeros((hidden, HEAD_PAD), jnp.float32)
    w_head = w_head.at[:, :n_actions].set(params["w3"])
    w_head = w_head.at[:, n_actions:n_actions + 1].set(params["w4"])

    b_head = jnp.zeros((1, HEAD_PAD), jnp.float32)
    b_head = b_head.at[:, :n_actions].set(params["b3"])
    b_head = b_head.at[:, n_actions:n_actions + 1].set(params["b4"])

    b12 = jnp.concatenate([params["b1"], params["b2"]], axis=0)  # [2, hidden]
    fused = (params["w1"], b12, params["w2"], w_head, b_head)
    return fused, n_actions


@functools.partial(jax.jit, static_argnames=("n_actions", "batch_tile"))
def actor_critic_forward(x, w1, b12, w2, w_head, b_head, *, n_actions,
                         batch_tile=4096):
    """x: [B, n_features] f32. Returns (action_dist [B, n_actions], value [B, 1])."""
    B, n_features = x.shape
    hidden = w1.shape[1]

    # Narrow output: n_actions logits + 1 value, padded up to 8 lanes.
    out_w = max(8, ((n_actions + 1 + 7) // 8) * 8)

    # Batch tile: big tiles amortize the ~0.35 us per-grid-step overhead.  For
    # B >= 16 force at least 2 grid steps so the "parallel" batch axis shards
    # across both TensorCores on v7x (neutral on v5e/v6e).
    TB = min(batch_tile, B)
    if B >= 16:
        TB = min(TB, pl.cdiv(B, 2))
    if TB != B:
        TB = max(8, (TB // 8) * 8)
    grid = (pl.cdiv(B, TB),)

    const = lambda i: (0, 0)  # weights/biases stay VMEM-resident across the grid

    cost = pl.CostEstimate(
        flops=2 * B * (n_features * hidden + hidden * hidden + hidden * HEAD_PAD),
        transcendentals=B * (HEAD_PAD + 1),          # exp over head cols + reciprocal
        bytes_accessed=4 * (B * n_features + B * out_w
                            + n_features * hidden + 2 * hidden
                            + hidden * hidden + hidden * HEAD_PAD + HEAD_PAD),
    )

    out = pl.pallas_call(
        functools.partial(actor_critic_kernel, n_actions=n_actions),
        out_shape=jax.ShapeDtypeStruct((B, out_w), jnp.float32),
        grid=grid,
        in_specs=[
            pl.BlockSpec((TB, n_features), lambda i: (i, 0)),   # x
            pl.BlockSpec((n_features, hidden), const),          # w1
            pl.BlockSpec((2, hidden), const),                   # b1|b2 packed
            pl.BlockSpec((hidden, hidden), const),              # w2
            pl.BlockSpec((hidden, HEAD_PAD), const),            # fused head weights
            pl.BlockSpec((1, HEAD_PAD), const),                 # fused head bias
        ],
        out_specs=pl.BlockSpec((TB, out_w), lambda i: (i, 0)),
        compiler_params=pltpu.CompilerParams(
            dimension_semantics=("parallel",),       # shards batch across TCs on v7x
            vmem_limit_bytes=32 << 20,               # headroom for huge batch tiles (v5e)
        ),
        cost_estimate=cost,
    )(x, w1, b12, w2, w_head, b_head)

    # Narrow slices of the already-narrow output; fused by XLA under jit.
    dist = out[:, :n_actions]
    value = out[:, n_actions:n_actions + 1]
    return dist, value


def init_params(key, n_features, hidden_size, n_actions):
    """Deterministic synthetic parameters (same shapes as the PyTorch module)."""
    ks = jax.random.split(key, 8)

    def lin(kw, kb, fan_in, fan_out):
        # uniform init akin to nn.Linear default, bound = 1/sqrt(fan_in)
        bound = 1.0 / jnp.sqrt(jnp.float32(fan_in))
        w = jax.random.uniform(kw, (fan_in, fan_out), jnp.float32, -bound, bound)
        b = jax.random.uniform(kb, (1, fan_out), jnp.float32, -bound, bound)
        return w, b

    w1, b1 = lin(ks[0], ks[1], n_features, hidden_size)
    w2, b2 = lin(ks[2], ks[3], hidden_size, hidden_size)
    w3, b3 = lin(ks[4], ks[5], hidden_size, n_actions)
    w4, b4 = lin(ks[6], ks[7], hidden_size, 1)
    return dict(w1=w1, b1=b1, w2=w2, b2=b2, w3=w3, b3=b3, w4=w4, b4=b4)


def reference_forward(x, p):
    h1 = jnp.maximum(x @ p["w1"] + p["b1"], 0.0)
    h2 = jnp.maximum(h1 @ p["w2"] + p["b2"], 0.0)
    logits = h2 @ p["w3"] + p["b3"]
    dist = jax.nn.softmax(logits, axis=1)
    value = h2 @ p["w4"] + p["b4"]
    return dist, value


if __name__ == "__main__":
    n_actions = 4
    n_features = 16
    hidden_size = 40
    batch = 8

    key = jax.random.PRNGKey(0)
    k_x, k_p = jax.random.split(key)
    x = jax.random.normal(k_x, (batch, n_features), jnp.float32)
    params = init_params(k_p, n_features, hidden_size, n_actions)

    # Pack once per model (hoisted out of the per-step forward path).
    fused, n_act = pack_params(params)

    dist, value = jax.block_until_ready(
        actor_critic_forward(x, *fused, n_actions=n_act))

    ref_dist, ref_value = reference_forward(x, params)
    assert dist.shape == (batch, n_actions)
    assert value.shape == (batch, 1)
    # dist tolerance slightly relaxed for the EUP approx-reciprocal (+ Newton step)
    assert jnp.allclose(dist, ref_dist, atol=1e-4, rtol=1e-4)
    assert jnp.allclose(value, ref_value, atol=1e-5, rtol=1e-5)
    # rows of the softmax output must sum to 1
    assert jnp.allclose(jnp.sum(dist, axis=1), jnp.ones((batch,)), atol=1e-4)

    print("KERNEL_OK")
</pallas_src>

<mosaic_0001>
module attributes {stable_mosaic.version = 11 : i64} {
  func.func @actor_critic_kernel(%arg0: i32, %arg1: memref<8x16xf32, #tpu.memory_space<vmem>>, %arg2: memref<16x40xf32, #tpu.memory_space<vmem>>, %arg3: memref<2x40xf32, #tpu.memory_space<vmem>>, %arg4: memref<40x40xf32, #tpu.memory_space<vmem>>, %arg5: memref<40x128xf32, #tpu.memory_space<vmem>>, %arg6: memref<1x128xf32, #tpu.memory_space<vmem>>, %arg7: memref<8x8xf32, #tpu.memory_space<vmem>>) attributes {dimension_semantics = [#tpu.dimension_semantics<parallel>], iteration_bounds = array<i64: 1>, scalar_prefetch = 0 : i64, scratch_operands = 0 : i64, tpu.core_type = #tpu.core_type<tc>, window_params = [{transform_indices = @transform_0, window_bounds = array<i64: 8, 16>}, {pipeline_mode = #tpu.pipeline_mode<synchronous>, transform_indices = @transform_1, window_bounds = array<i64: 16, 40>}, {pipeline_mode = #tpu.pipeline_mode<synchronous>, transform_indices = @transform_2, window_bounds = array<i64: 2, 40>}, {pipeline_mode = #tpu.pipeline_mode<synchronous>, transform_indices = @transform_3, window_bounds = array<i64: 40, 40>}, {pipeline_mode = #tpu.pipeline_mode<synchronous>, transform_indices = @transform_4, window_bounds = array<i64: 40, 128>}, {pipeline_mode = #tpu.pipeline_mode<synchronous>, transform_indices = @transform_5, window_bounds = array<i64: 1, 128>}, {transform_indices = @transform_6, window_bounds = array<i64: 8, 8>}]} {
    %c0 = arith.constant 0 : index
    %c0_0 = arith.constant 0 : index
    %0 = vector.load %arg1[%c0, %c0_0] : memref<8x16xf32, #tpu.memory_space<vmem>>, vector<8x16xf32>
    %c0_1 = arith.constant 0 : index
    %c0_2 = arith.constant 0 : index
    %1 = vector.load %arg3[%c0_1, %c0_2] : memref<2x40xf32, #tpu.memory_space<vmem>>, vector<1x40xf32>
    %c1 = arith.constant 1 : index
    %c0_3 = arith.constant 0 : index
    %2 = vector.load %arg3[%c1, %c0_3] : memref<2x40xf32, #tpu.memory_space<vmem>>, vector<1x40xf32>
    %c0_4 = arith.constant 0 : index
    %c0_5 = arith.constant 0 : index
    %3 = vector.load %arg2[%c0_4, %c0_5] : memref<16x40xf32, #tpu.memory_space<vmem>>, vector<16x40xf32>
    %cst = arith.constant dense<0.000000e+00> : vector<8x40xf32>
    %4 = tpu.matmul %0, %3, %cst {dimension_numbers = #tpu.dot_dimension_numbers<[1], [0], [0], [1], [0, 0, 1, 1], [], []>} : vector<8x16xf32>, vector<16x40xf32>, vector<8x40xf32> -> vector<8x40xf32>
    %5 = vector.broadcast %1 : vector<1x40xf32> to vector<8x40xf32>
    %6 = arith.addf %4, %5 : vector<8x40xf32>
    %cst_6 = arith.constant 0.000000e+00 : f32
    %7 = vector.broadcast %cst_6 : f32 to vector<8x40xf32>
    %8 = arith.maximumf %6, %7 : vector<8x40xf32>
    %c0_7 = arith.constant 0 : index
    %c0_8 = arith.constant 0 : index
    %9 = vector.load %arg4[%c0_7, %c0_8] : memref<40x40xf32, #tpu.memory_space<vmem>>, vector<40x40xf32>
    %cst_9 = arith.constant dense<0.000000e+00> : vector<8x40xf32>
    %10 = tpu.matmul %8, %9, %cst_9 {dimension_numbers = #tpu.dot_dimension_numbers<[1], [0], [0], [1], [0, 0, 1, 1], [], []>} : vector<8x40xf32>, vector<40x40xf32>, vector<8x40xf32> -> vector<8x40xf32>
    %11 = vector.broadcast %2 : vector<1x40xf32> to vector<8x40xf32>
    %12 = arith.addf %10, %11 : vector<8x40xf32>
    %cst_10 = arith.constant 0.000000e+00 : f32
    %13 = vector.broadcast %cst_10 : f32 to vector<8x40xf32>
    %14 = arith.maximumf %12, %13 : vector<8x40xf32>
    %c0_11 = arith.constant 0 : index
    %c0_12 = arith.constant 0 : index
    %15 = vector.load %arg5[%c0_11, %c0_12] : memref<40x128xf32, #tpu.memory_space<vmem>>, vector<40x128xf32>
    %cst_13 = arith.constant dense<0.000000e+00> : vector<8x128xf32>
    %16 = tpu.matmul %14, %15, %cst_13 {dimension_numbers = #tpu.dot_dimension_numbers<[1], [0], [0], [1], [0, 0, 1, 1], [], []>} : vector<8x40xf32>, vector<40x128xf32>, vector<8x128xf32> -> vector<8x128xf32>
    %c0_14 = arith.constant 0 : index
    %c0_15 = arith.constant 0 : index
    %17 = vector.load %arg6[%c0_14, %c0_15] : memref<1x128xf32, #tpu.memory_space<vmem>>, vector<1x128xf32>
    %18 = vector.broadcast %17 : vector<1x128xf32> to vector<8x128xf32>
    %19 = arith.addf %16, %18 : vector<8x128xf32>
    %20 = tpu.iota {dimensions = array<i32: 1>} : vector<8x128xi32>
    %c4_i32 = arith.constant 4 : i32
    %21 = vector.broadcast %c4_i32 : i32 to vector<8x128xi32>
    %22 = arith.cmpi slt, %20, %21 : vector<8x128xi32>
    %cst_16 = arith.constant 0xFF800000 : f32
    %23 = vector.broadcast %cst_16 : f32 to vector<8x128xf32>
    %24 = arith.select %22, %19, %23 : vector<8x128xi1>, vector<8x128xf32>
    %cst_17 = arith.constant dense<0xFF800000> : vector<8xf32>
    %25 = vector.multi_reduction <maximumf>, %24, %cst_17 [1] : vector<8x128xf32> to vector<8xf32>
    %26 = vector.shape_cast %25 : vector<8xf32> to vector<8x1xf32>
    %27 = vector.broadcast %26 : vector<8x1xf32> to vector<8x128xf32>
    %28 = arith.subf %24, %27 : vector<8x128xf32>
    %29 = math.exp %28 : vector<8x128xf32>
    %cst_18 = arith.constant dense<0.000000e+00> : vector<8xf32>
    %30 = vector.multi_reduction <add>, %29, %cst_18 [1] : vector<8x128xf32> to vector<8xf32>
    %31 = vector.shape_cast %30 : vector<8xf32> to vector<8x1xf32>
    %32 = tpu.reciprocal %31 {approx = true} : vector<8x1xf32> -> vector<8x1xf32>
    %33 = arith.mulf %31, %32 : vector<8x1xf32>
    %cst_19 = arith.constant 2.000000e+00 : f32
    %34 = vector.broadcast %cst_19 : f32 to vector<8x1xf32>
    %35 = arith.subf %34, %33 : vector<8x1xf32>
    %36 = arith.mulf %32, %35 : vector<8x1xf32>
    %37 = vector.broadcast %36 : vector<8x1xf32> to vector<8x128xf32>
    %38 = arith.mulf %29, %37 : vector<8x128xf32>
    %39 = arith.select %22, %38, %19 : vector<8x128xi1>, vector<8x128xf32>
    %40 = vector.extract_strided_slice %39 {offsets = [0, 0], sizes = [8, 8], strides = [1, 1]} : vector<8x128xf32> to vector<8x8xf32>
    %c0_20 = arith.constant 0 : index
    %c0_21 = arith.constant 0 : index
    %41 = vector.load %arg7[%c0_20, %c0_21] : memref<8x8xf32, #tpu.memory_space<vmem>>, vector<8x8xf32>
    tpu.vector_store %arg7[%c0_20, %c0_21], %40 {strides = array<i32>} : memref<8x8xf32, #tpu.memory_space<vmem>>, vector<8x8xf32>,
    return
  }
  func.func @transform_0(%arg0: i32) -> (i32, i32) {
    %c0_i32 = arith.constant 0 : i32
    %c0_i32_0 = arith.constant 0 : i32
    return %arg0, %c0_i32 : i32, i32
  }
  func.func @transform_1(%arg0: i32) -> (i32, i32) {
    %c0_i32 = arith.constant 0 : i32
    %c0_i32_0 = arith.constant 0 : i32
    %c0_i32_1 = arith.constant 0 : i32
    return %c0_i32, %c0_i32_0 : i32, i32
  }
  func.func @transform_2(%arg0: i32) -> (i32, i32) {
    %c0_i32 = arith.constant 0 : i32
    %c0_i32_0 = arith.constant 0 : i32
    %c0_i32_1 = arith.constant 0 : i32
    return %c0_i32, %c0_i32_0 : i32, i32
  }
  func.func @transform_3(%arg0: i32) -> (i32, i32) {
    %c0_i32 = arith.constant 0 : i32
    %c0_i32_0 = arith.constant 0 : i32
    %c0_i32_1 = arith.constant 0 : i32
    return %c0_i32, %c0_i32_0 : i32, i32
  }
  func.func @transform_4(%arg0: i32) -> (i32, i32) {
    %c0_i32 = arith.constant 0 : i32
    %c0_i32_0 = arith.constant 0 : i32
    %c0_i32_1 = arith.constant 0 : i32
    return %c0_i32, %c0_i32_0 : i32, i32
  }
  func.func @transform_5(%arg0: i32) -> (i32, i32) {
    %c0_i32 = arith.constant 0 : i32
    %c0_i32_0 = arith.constant 0 : i32
    %c0_i32_1 = arith.constant 0 : i32
    return %c0_i32, %c0_i32_0 : i32, i32
  }
  func.func @transform_6(%arg0: i32) -> (i32, i32) {
    %c0_i32 = arith.constant 0 : i32
    %c0_i32_0 = arith.constant 0 : i32
    return %arg0, %c0_i32 : i32, i32
  }
}

</mosaic_0001>

<llo_original>
// kernel: actor_critic_forward.1
$region0: #{actor_critic_forward.1}
  #allocation0 [shape = 'u32[]', space=smem, size = 0x4, offset = 0x4, fixed_abs, tag = 'smem constant byte address 0x4 - core index']
  #allocation1 [shape = 'u32[144,128]{1,0:T(1,128)}', space=vmem, size = 0x12000, scoped, tag = 'internal scratch']
  %s0 = inlined_call_operand.hbm [shape: f32[8,16], index: 0, kind: input, shape index: {}]
  %s1 = inlined_call_operand.hbm [shape: f32[16,40], index: 1, kind: input, shape index: {}]
  %s2 = inlined_call_operand.vmem [shape: f32[2,40], index: 2, kind: input, shape index: {}]
  %s3 = inlined_call_operand.hbm [shape: f32[40,40], index: 3, kind: input, shape index: {}]
  %s4 = inlined_call_operand.hbm [shape: f32[40,128], index: 4, kind: input, shape index: {}]
  %s5 = inlined_call_operand.vmem [shape: f32[1,128], index: 5, kind: input, shape index: {}]
  %s6 = inlined_call_operand.vmem [shape: f32[8,8], index: 6, kind: output, shape index: {}]
  %s7 = sld [smem:[#allocation0]]
  $region50: #{actor_critic_forward.1} parent=0
    _
  %s9 = ssub.s32 1, %s7
  %s10 = scalar_select 0, %s9, %s7
  $region1: #{actor_critic_forward.1} parent=0
    #allocation2 [shape = 'u8[4096]{0}', space=vmem, size = 0x1000, scoped, tag = 'input window, operand 0, single buffered']
    #allocation3 [shape = 's32[1]{0}', space=sflag, size = 0x4, scoped, tag = 'scoped memory for actor_critic_forward.1']
    #allocation4 [shape = 'u8[8192]{0}', space=vmem, size = 0x2000, scoped, tag = 'input window, operand 1, single buffered']
    #allocation5 [shape = 's32[1]{0}', space=sflag, size = 0x4, scoped, tag = 'scoped memory for actor_critic_forward.1']
    #allocation6 [shape = 'u8[20480]{0}', space=vmem, size = 0x5000, scoped, tag = 'input window, operand 3, single buffered']
    #allocation7 [shape = 'u8[20480]{0}', space=vmem, size = 0x5000, scoped, tag = 'input window, operand 4, single buffered']
    #allocation8 [shape = 's32[1]{0}', space=sflag, size = 0x4, scoped, tag = 'scoped memory for actor_critic_forward.1']
    %11 = vsyncpa [#allocation3], 0
    %12 = vsyncpa [#allocation5], 0
    %13 = vsyncpa [#allocation8], 0
    // Predicated region
    $region2: #{actor_critic_forward.1} parent=1 // pred_check
      _
    $region3: #{actor_critic_forward.1} parent=1 // pred_check_branch
      %15 = sbr.rel (0) target = $region5
    $region4: #{actor_critic_forward.1} parent=1 // pred_region
      %s17 = ssub.s32 128, 128
      %18 = vsyncadd [#allocation3], %s17
      %s20 = sshll.u32 [#allocation2], 4
      %s21 = int_to_ptr.vmem [resolvable:$true] %s20
      %23 = dma.hbm_to_vmem [thread:$0]  %s0, 128, %s21, [#allocation3]
    $region5: #{actor_critic_forward.1} parent=1 // pred_fallthru
      _
    // Predicated region
    $region6: #{actor_critic_forward.1} parent=1 // pred_check
      _
    $region7: #{actor_critic_forward.1} parent=1 // pred_check_branch
      %25 = sbr.rel (0) target = $region9
    $region8: #{actor_critic_forward.1} parent=1 // pred_region
      %s27 = ssub.s32 256, 256
      %28 = vsyncadd [#allocation5], %s27
      %s29 = sshll.u32 [#allocation4], 4
      %s30 = int_to_ptr.vmem [resolvable:$true] %s29
      %35 = dma.hbm_to_vmem [thread:$0]  %s1, 256, %s30, [#allocation5], 128, 128, 8
    $region9: #{actor_critic_forward.1} parent=1 // pred_fallthru
      _
    // Predicated region
    $region10: #{actor_critic_forward.1} parent=1 // pred_check
      _
    $region11: #{actor_critic_forward.1} parent=1 // pred_check_branch
      %37 = sbr.rel (0) target = $region13
    $region12: #{actor_critic_forward.1} parent=1 // pred_region
      _
    $region13: #{actor_critic_forward.1} parent=1 // pred_fallthru
      _
    // Predicated region
    $region14: #{actor_critic_forward.1} parent=1 // pred_check
      _
    $region15: #{actor_critic_forward.1} parent=1 // pred_check_branch
      %39 = sbr.rel (0) target = $region17
    $region16: #{actor_critic_forward.1} parent=1 // pred_region
      %s41 = ssub.s32 640, 640
      %42 = vsyncadd [#allocation5], %s41
      %s43 = sshll.u32 [#allocation6], 4
      %s44 = int_to_ptr.vmem [resolvable:$true] %s43
      %49 = dma.hbm_to_vmem [thread:$0]  %s3, 640, %s44, [#allocation5], 128, 128, 8
    $region17: #{actor_critic_forward.1} parent=1 // pred_fallthru
      _
    // Predicated region
    $region18: #{actor_critic_forward.1} parent=1 // pred_check
      _
    $region19: #{actor_critic_forward.1} parent=1 // pred_check_branch
      %51 = sbr.rel (0) target = $region21
    $region20: #{actor_critic_forward.1} parent=1 // pred_region
      %s53 = ssub.s32 640, 640
      %54 = vsyncadd [#allocation8], %s53
      %s55 = sshll.u32 [#allocation7], 4
      %s56 = int_to_ptr.vmem [resolvable:$true] %s55
      %61 = dma.hbm_to_vmem [thread:$0]  %s4, 640, %s56, [#allocation8], 128, 128, 8
    $region21: #{actor_critic_forward.1} parent=1 // pred_fallthru
      _
    // Predicated region
    $region22: #{actor_critic_forward.1} parent=1 // pred_check
      _
    $region23: #{actor_critic_forward.1} parent=1 // pred_check_branch
      %63 = sbr.rel (0) target = $region25
    $region24: #{actor_critic_forward.1} parent=1 // pred_region
      _
    $region25: #{actor_critic_forward.1} parent=1 // pred_fallthru
      _
    // Predicated region
    $region26: #{actor_critic_forward.1} parent=1 // pred_check
      _
    $region27: #{actor_critic_forward.1} parent=1 // pred_check_branch
      %65 = sbr.rel (0) target = $region29
    $region28: #{actor_critic_forward.1} parent=1 // pred_region
      %66 = dma.done [#allocation3], 128
    $region29: #{actor_critic_forward.1} parent=1 // pred_fallthru
      _
    // Predicated region
    $region30: #{actor_critic_forward.1} parent=1 // pred_check
      _
    $region31: #{actor_critic_forward.1} parent=1 // pred_check_branch
      %68 = sbr.rel (0) target = $region33
    $region32: #{actor_critic_forward.1} parent=1 // pred_region
      %69 = dma.done [#allocation5], 256
    $region33: #{actor_critic_forward.1} parent=1 // pred_fallthru
      _
    // Predicated region
    $region34: #{actor_critic_forward.1} parent=1 // pred_check
      _
    $region35: #{actor_critic_forward.1} parent=1 // pred_check_branch
      %71 = sbr.rel (0) target = $region37
    $region36: #{actor_critic_forward.1} parent=1 // pred_region
      %72 = dma.done [#allocation5], 640
    $region37: #{actor_critic_forward.1} parent=1 // pred_fallthru
      _
    // Predicated region
    $region38: #{actor_critic_forward.1} parent=1 // pred_check
      _
    $region39: #{actor_critic_forward.1} parent=1 // pred_check_branch
      %74 = sbr.rel (0) target = $region41
    $region40: #{actor_critic_forward.1} parent=1 // pred_region
      %75 = dma.done [#allocation8], 640
    $region41: #{actor_critic_forward.1} parent=1 // pred_fallthru
      _
    %v76 = vld [vmem:[#allocation2] sm:$0xff]
    %v77 = vld [vmem:[%s2] sm:$0x1]
    %v78 = vld [vmem:[%s2 + $0x1] sm:$0x1]
    %v79 = vld [vmem:[#allocation4] sm:$0xff]
    %v80 = vld [vmem:[#allocation4 + $0x8] sm:$0xff]
    %v81 = vlaneseq
    %v82 = vshrl.u32 %v81, 7
    %v83 = vsub.s32 0, %v82
    %v84 = vrot.slane %v77, %v83
    %vm85 = vcmask 130048
    %v87 = vsel %vm85, %v76, 0
    %89 = vmatprep.subr.mxu0 0.0
    %90 = vmatpush1.msra.mxu0 0.0
    %91 = vmatprep.subr.mxu0 0.0
    %92 = vmatpush1.msra.mxu0 0.0
    %93 = vmatprep.subr.mxu0 0.0
    %94 = vmatpush1.msra.mxu0 0.0
    %95 = vmatprep.subr.mxu0 0.0
    %96 = vmatpush1.msra.mxu0 0.0
    %97 = vmatprep.subr.mxu0 0.0
    %98 = vmatpush1.msra.mxu0 0.0
    %99 = vmatprep.subr.mxu0 0.0
    %100 = vmatpush1.msra.mxu0 0.0
    %101 = vmatprep.subr.mxu0 0.0
    %102 = vmatpush1.msra.mxu0 0.0
    %103 = vmatprep.subr.mxu0 0.0
    %104 = vmatpush1.msra.mxu0 0.0
    %105 = vmatprep.subr.mxu0 0.0
    %106 = vmatpush1.msra.mxu0 0.0
    %107 = vmatprep.subr.mxu0 0.0
    %108 = vmatpush1.msra.mxu0 0.0
    %109 = vmatprep.subr.mxu0 0.0
    %110 = vmatpush1.msra.mxu0 0.0
    %111 = vmatprep.subr.mxu0 0.0
    %112 = vmatpush1.msra.mxu0 0.0
    %113 = vmatprep.subr.mxu0 0.0
    %114 = vmatpush1.msra.mxu0 0.0
    %115 = vmatprep.subr.mxu0 0.0
    %116 = vmatpush1.msra.mxu0 0.0
    %117 = vmatprep.subr.mxu0 0.0
    %118 = vmatpush1.msra.mxu0 %v80
    %119 = vmatprep.subr.mxu0 0.0
    %120 = vmatpush1.msra.mxu0 %v79
    %121 = vmatprep.subr.mxu0 0.0
    %122 = vmatpush2.msra.mxu0 0.0
    %123 = vmatprep.subr.mxu0 0.0
    %124 = vmatpush2.msra.mxu0 0.0
    %125 = vmatprep.subr.mxu0 0.0
    %126 = vmatpush2.msra.mxu0 0.0
    %127 = vmatprep.subr.mxu0 0.0
    %128 = vmatpush2.msra.mxu0 0.0
    %129 = vmatprep.subr.mxu0 0.0
    %130 = vmatpush2.msra.mxu0 0.0
    %131 = vmatprep.subr.mxu0 0.0
    %132 = vmatpush2.msra.mxu0 0.0
    %133 = vmatprep.subr.mxu0 0.0
    %134 = vmatpush2.msra.mxu0 0.0
    %135 = vmatprep.subr.mxu0 0.0
    %136 = vmatpush2.msra.mxu0 0.0
    %137 = vmatprep.subr.mxu0 0.0
    %138 = vmatpush2.msra.mxu0 0.0
    %139 = vmatprep.subr.mxu0 0.0
    %140 = vmatpush2.msra.mxu0 0.0
    %141 = vmatprep.subr.mxu0 0.0
    %142 = vmatpush2.msra.mxu0 0.0
    %143 = vmatprep.subr.mxu0 0.0
    %144 = vmatpush2.msra.mxu0 0.0
    %145 = vmatprep.subr.mxu0 0.0
    %146 = vmatpush2.msra.mxu0 0.0
    %147 = vmatprep.subr.mxu0 0.0
    %148 = vmatpush2.msra.mxu0 0.0
    %149 = vmatprep.subr.mxu0 0.0
    %150 = vmatpush2.msra.mxu0 0.0
    %151 = vmatprep.subr.mxu0 0.0
    %152 = vmatpush2.msra.mxu0 0.0
    %153 = vmatprep.mubr.f32.mxu0 0.0
    %154 = vmatmul.mubr.f32.gmra.mxu0 %v87
    %v155 = vpop.f32.mrf.mxu0
    %v156 = vadd.f32 %v84, %v155
    %v157 = vpop.f32.mrf.mxu0
    %158 = vdwg.mxu0
    %v159 = vmax.f32 %v156, 0.0
    %v160 = vld [vmem:[#allocation6] sm:$0xff]
    %v161 = vld [vmem:[#allocation6 + $0x8] sm:$0xff]
    %v162 = vld [vmem:[#allocation6 + $0x10] sm:$0xff]
    %v163 = vld [vmem:[#allocation6 + $0x18] sm:$0xff]
    %v164 = vld [vmem:[#allocation6 + $0x20] sm:$0xff]
    %v165 = vlaneseq
    %v166 = vshrl.u32 %v165, 7
    %v167 = vsub.s32 0, %v166
    %v168 = vrot.slane %v78, %v167
    %vm169 = vcmask 326656
    %v171 = vsel %vm169, %v159, 0
    %173 = vmatprep.subr.mxu0 0.0
    %174 = vmatpush1.msra.mxu0 0.0
    %175 = vmatprep.subr.mxu0 0.0
    %176 = vmatpush1.msra.mxu0 0.0
    %177 = vmatprep.subr.mxu0 0.0
    %178 = vmatpush1.msra.mxu0 0.0
    %179 = vmatprep.subr.mxu0 0.0
    %180 = vmatpush1.msra.mxu0 0.0
    %181 = vmatprep.subr.mxu0 0.0
    %182 = vmatpush1.msra.mxu0 0.0
    %183 = vmatprep.subr.mxu0 0.0
    %184 = vmatpush1.msra.mxu0 0.0
    %185 = vmatprep.subr.mxu0 0.0
    %186 = vmatpush1.msra.mxu0 0.0
    %187 = vmatprep.subr.mxu0 0.0
    %188 = vmatpush1.msra.mxu0 0.0
    %189 = vmatprep.subr.mxu0 0.0
    %190 = vmatpush1.msra.mxu0 0.0
    %191 = vmatprep.subr.mxu0 0.0
    %192 = vmatpush1.msra.mxu0 0.0
    %193 = vmatprep.subr.mxu0 0.0
    %194 = vmatpush1.msra.mxu0 0.0
    %195 = vmatprep.subr.mxu0 0.0
    %196 = vmatpush1.msra.mxu0 %v164
    %197 = vmatprep.subr.mxu0 0.0
    %198 = vmatpush1.msra.mxu0 %v163
    %199 = vmatprep.subr.mxu0 0.0
    %200 = vmatpush1.msra.mxu0 %v162
    %201 = vmatprep.subr.mxu0 0.0
    %202 = vmatpush1.msra.mxu0 %v161
    %203 = vmatprep.subr.mxu0 0.0
    %204 = vmatpush1.msra.mxu0 %v160
    %205 = vmatprep.subr.mxu0 0.0
    %206 = vmatpush2.msra.mxu0 0.0
    %207 = vmatprep.subr.mxu0 0.0
    %208 = vmatpush2.msra.mxu0 0.0
    %209 = vmatprep.subr.mxu0 0.0
    %210 = vmatpush2.msra.mxu0 0.0
    %211 = vmatprep.subr.mxu0 0.0
    %212 = vmatpush2.msra.mxu0 0.0
    %213 = vmatprep.subr.mxu0 0.0
    %214 = vmatpush2.msra.mxu0 0.0
    %215 = vmatprep.subr.mxu0 0.0
    %216 = vmatpush2.msra.mxu0 0.0
    %217 = vmatprep.subr.mxu0 0.0
    %218 = vmatpush2.msra.mxu0 0.0
    %219 = vmatprep.subr.mxu0 0.0
    %220 = vmatpush2.msra.mxu0 0.0
    %221 = vmatprep.subr.mxu0 0.0
    %222 = vmatpush2.msra.mxu0 0.0
    %223 = vmatprep.subr.mxu0 0.0
    %224 = vmatpush2.msra.mxu0 0.0
    %225 = vmatprep.subr.mxu0 0.0
    %226 = vmatpush2.msra.mxu0 0.0
    %227 = vmatprep.subr.mxu0 0.0
    %228 = vmatpush2.msra.mxu0 0.0
    %229 = vmatprep.subr.mxu0 0.0
    %230 = vmatpush2.msra.mxu0 0.0
    %231 = vmatprep.subr.mxu0 0.0
    %232 = vmatpush2.msra.mxu0 0.0
    %233 = vmatprep.subr.mxu0 0.0
    %234 = vmatpush2.msra.mxu0 0.0
    %235 = vmatprep.subr.mxu0 0.0
    %236 = vmatpush2.msra.mxu0 0.0
    %237 = vmatprep.mubr.f32.mxu0 0.0
    %238 = vmatmul.mubr.f32.gmra.mxu0 %v171
    %v239 = vpop.f32.mrf.mxu0
    %v240 = vadd.f32 %v168, %v239
    %v241 = vpop.f32.mrf.mxu0
    %242 = vdwg.mxu0
    %v243 = vmax.f32 %v240, 0.0
    %v244 = vld [vmem:[#allocation7] sm:$0xff]
    %v245 = vld [vmem:[#allocation7 + $0x8] sm:$0xff]
    %v246 = vld [vmem:[#allocation7 + $0x10] sm:$0xff]
    %v247 = vld [vmem:[#allocation7 + $0x18] sm:$0xff]
    %v248 = vld [vmem:[#allocation7 + $0x20] sm:$0xff]
    %v249 = vld [vmem:[%s5] sm:$0x1]
    %v251 = vlaneseq
    %v252 = vshrl.u32 %v251, 7
    %v253 = vsub.s32 0, %v252
    %v254 = vrot.slane %v249, %v253
    %v257 = vsel %vm169, %v243, 0
    %259 = vmatprep.subr.mxu0 0.0
    %260 = vmatpush1.msra.mxu0 0.0
    %261 = vmatprep.subr.mxu0 0.0
    %262 = vmatpush1.msra.mxu0 0.0
    %263 = vmatprep.subr.mxu0 0.0
    %264 = vmatpush1.msra.mxu0 0.0
    %265 = vmatprep.subr.mxu0 0.0
    %266 = vmatpush1.msra.mxu0 0.0
    %267 = vmatprep.subr.mxu0 0.0
    %268 = vmatpush1.msra.mxu0 0.0
    %269 = vmatprep.subr.mxu0 0.0
    %270 = vmatpush1.msra.mxu0 0.0
    %271 = vmatprep.subr.mxu0 0.0
    %272 = vmatpush1.msra.mxu0 0.0
    %273 = vmatprep.subr.mxu0 0.0
    %274 = vmatpush1.msra.mxu0 0.0
    %275 = vmatprep.subr.mxu0 0.0
    %276 = vmatpush1.msra.mxu0 0.0
    %277 = vmatprep.subr.mxu0 0.0
    %278 = vmatpush1.msra.mxu0 0.0
    %279 = vmatprep.subr.mxu0 0.0
    %280 = vmatpush1.msra.mxu0 0.0
    %281 = vmatprep.subr.mxu0 0.0
    %282 = vmatpush1.msra.mxu0 %v248
    %283 = vmatprep.subr.mxu0 0.0
    %284 = vmatpush1.msra.mxu0 %v247
    %285 = vmatprep.subr.mxu0 0.0
    %286 = vmatpush1.msra.mxu0 %v246
    %287 = vmatprep.subr.mxu0 0.0
    %288 = vmatpush1.msra.mxu0 %v245
    %289 = vmatprep.subr.mxu0 0.0
    %290 = vmatpush1.msra.mxu0 %v244
    %291 = vmatprep.subr.mxu0 0.0
    %292 = vmatpush2.msra.mxu0 0.0
    %293 = vmatprep.subr.mxu0 0.0
    %294 = vmatpush2.msra.mxu0 0.0
    %295 = vmatprep.subr.mxu0 0.0
    %296 = vmatpush2.msra.mxu0 0.0
    %297 = vmatprep.subr.mxu0 0.0
    %298 = vmatpush2.msra.mxu0 0.0
    %299 = vmatprep.subr.mxu0 0.0
    %300 = vmatpush2.msra.mxu0 0.0
    %301 = vmatprep.subr.mxu0 0.0
    %302 = vmatpush2.msra.mxu0 0.0
    %303 = vmatprep.subr.mxu0 0.0
    %304 = vmatpush2.msra.mxu0 0.0
    %305 = vmatprep.subr.mxu0 0.0
    %306 = vmatpush2.msra.mxu0 0.0
    %307 = vmatprep.subr.mxu0 0.0
    %308 = vmatpush2.msra.mxu0 0.0
    %309 = vmatprep.subr.mxu0 0.0
    %310 = vmatpush2.msra.mxu0 0.0
    %311 = vmatprep.subr.mxu0 0.0
    %312 = vmatpush2.msra.mxu0 0.0
    %313 = vmatprep.subr.mxu0 0.0
    %314 = vmatpush2.msra.mxu0 0.0
    %315 = vmatprep.subr.mxu0 0.0
    %316 = vmatpush2.msra.mxu0 0.0
    %317 = vmatprep.subr.mxu0 0.0
    %318 = vmatpush2.msra.mxu0 0.0
    %319 = vmatprep.subr.mxu0 0.0
    %320 = vmatpush2.msra.mxu0 0.0
    %321 = vmatprep.subr.mxu0 0.0
    %322 = vmatpush2.msra.mxu0 0.0
    %323 = vmatprep.mubr.f32.mxu0 0.0
    %324 = vmatmul.mubr.f32.gmra.mxu0 %v257
    %v325 = vpop.f32.mrf.mxu0
    %v326 = vadd.f32 %v254, %v325
    %v327 = vpop.f32.mrf.mxu0
    %328 = vdwg.mxu0
    %v329 = vlaneseq
    %v330 = vand.u32 %v329, 127
    %vm331 = vcmp.lt.s32.totalorder %v330, 4
    %v332 = vsel %vm331, %v326, -inf
    %333 = vmax.xlane.f32.xlu0 %v332
    %v334 = vpop.xlane.xlu0 %333
    %v335 = vsub.f32 %v332, %v334
    %v336 = vmul.f32 %v335, 1.442695
    %v337 = vpow.pop %v336
    %338 = vadd.xlane.f32.xlu0 %v337
    %v339 = vpop.xlane.xlu0 %338
    %v340 = vrcp.pop %v339
    %v341 = vmul.f32 %v339, %v340
    %v342 = vsub.f32 2.0, %v341
    %v343 = vmul.f32 %v340, %v342
    %v344 = vmul.f32 %v337, %v343
    %v345 = vsel %vm331, %v344, %v326
    %vm346 = vcmask 64512
    %347 = vst.msk [vmem:[%s6] sm:$0xff] %vm346, %v345
    // Predicated region
    $region42: #{actor_critic_forward.1} parent=1 // pred_check
      _
    $region43: #{actor_critic_forward.1} parent=1 // pred_check_branch
      %349 = sbr.rel (0) target = $region45
    $region44: #{actor_critic_forward.1} parent=1 // pred_region
      _
    $region45: #{actor_critic_forward.1} parent=1 // pred_fallthru
      _
    // Predicated region
    $region46: #{actor_critic_forward.1} parent=1 // pred_check
      _
    $region47: #{actor_critic_forward.1} parent=1 // pred_check_branch
      %351 = sbr.rel (0) target = $region49
    $region48: #{actor_critic_forward.1} parent=1 // pred_region
      _
    $region49: #{actor_critic_forward.1} parent=1 // pred_fallthru
      _
    %352 = vsyncpa [#allocation3], 1
    %353 = vsyncpa [#allocation5], 1
    %354 = vsyncpa [#allocation8], 1

</llo_original>
